<compile_context>
chip_gen: v7x
topology: tpu7x:2x2x1
jax: 0.10.0
libtpu: 0.0.40
codegen_flags: <defaults>
</compile_context>

<pallas_src>
import math

import jax
import jax.numpy as jnp
from jax.experimental import pallas as pl
from jax.experimental.pallas import tpu as pltpu


def _llsa_kernel(w_ref, b_ref, series_ref, loss_ref, diff_ref):
    """Per-window linear-prediction MSE, fully on the VPU.

    w_ref:      (H, W)     SMEM  nn.Linear weight (PyTorch layout)
    b_ref:      (H,)       SMEM  nn.Linear bias
    series_ref: (B, T_pad) VMEM  raw series, zero-padded on the right
    loss_ref:   (1, N_pad) VMEM  per-window MSE losses (lane axis = window index)
    diff_ref:   (1, N_pad) VMEM  |loss[i] - loss[i-1]| with diff[0] = 0
    """
    B = series_ref.shape[0]
    H, W = w_ref.shape
    n_pad = loss_ref.shape[1]

    # W+1 shifted views: xs[w][b, n] == series[b, n + w].
    # Window inputs are xs[0..W-1]; the shifted target for hidden index h is xs[h+1].
    xs = [series_ref[:, w:w + n_pad] for w in range(W + 1)]

    sq = jnp.zeros((B, n_pad), jnp.float32)
    for h in range(H):
        t = xs[0] * w_ref[h, 0]
        for w in range(1, W):
            t = t + xs[w] * w_ref[h, w]
        t = t + b_ref[h]
        d = t - xs[h + 1]
        sq = sq + d * d

    # Mean over (batch, hidden): one sublane reduction, then a scalar scale.
    loss = jnp.sum(sq, axis=0, keepdims=True) * (1.0 / (B * H))   # (1, n_pad)
    loss_ref[...] = loss

    # Emit |loss[i] - loss[i-1]| so the host only scans a precomputed vector.
    prev = pltpu.roll(loss, shift=1, axis=1)
    lane = jax.lax.broadcasted_iota(jnp.int32, (1, n_pad), 1)
    diff_ref[...] = jnp.where(lane == 0, jnp.float32(0.0), jnp.abs(loss - prev))


def llsa_losses(series, weight, bias):
    """series: (B, T) f32; weight: (H, W) PyTorch layout; bias: (H,).
    Returns (losses, diffs), both (N,) with N = T - W."""
    B, T = series.shape
    H, W = weight.shape
    assert H == W, "F.mse_loss in the reference requires hidden_size == window_size"
    N = T - W
    assert N >= 1

    # Lane-dense output width; pad the series so every shifted slab is in range.
    n_pad = ((N + 127) // 128) * 128
    t_pad = n_pad + W
    series_p = jnp.pad(series.astype(jnp.float32), ((0, 0), (0, t_pad - T)))

    losses, diffs = pl.pallas_call(
        _llsa_kernel,
        out_shape=(
            jax.ShapeDtypeStruct((1, n_pad), jnp.float32),
            jax.ShapeDtypeStruct((1, n_pad), jnp.float32),
        ),
        # grid=() — a single program; the raw series is one small VMEM block.
        in_specs=[
            pl.BlockSpec(memory_space=pltpu.MemorySpace.SMEM),   # weight (H, W)
            pl.BlockSpec(memory_space=pltpu.MemorySpace.SMEM),   # bias (H,)
            pl.BlockSpec((B, t_pad), lambda: (0, 0)),            # raw series, no X/Y gather
        ],
        out_specs=(
            pl.BlockSpec((1, n_pad), lambda: (0, 0)),
            pl.BlockSpec((1, n_pad), lambda: (0, 0)),
        ),
    )(weight.astype(jnp.float32), bias.astype(jnp.float32), series_p)
    return losses[0, :N], diffs[0, :N]


def llsa_forward(series, weight, bias, threshold):
    """Reproduces LLSA.forward: returns (change_points, losses)."""
    losses, diffs = llsa_losses(series, weight, bias)
    # TODO(synk): the variable-length change_points list (PyTorch uses .item()) is
    # data-dependent host control flow; it is rebuilt here from the kernel's diff output.
    dv = jax.device_get(diffs)
    thr = float(threshold)
    change_points = []
    for i in range(1, dv.shape[0]):
        d = float(dv[i])
        if d > thr:
            change_points.append((i, d))
    return change_points, losses


def _ref_losses(series, weight, bias):
    """Pure-JAX reference mirroring the PyTorch loop (sanity check)."""
    B, T = series.shape
    H, W = weight.shape
    N = T - W
    outs = []
    for i in range(N):
        local = series[:, i:i + W]
        target = series[:, i + 1:i + W + 1]
        t = local @ weight.T + bias
        outs.append(jnp.mean((t - target) ** 2))
    return jnp.stack(outs)


if __name__ == "__main__":
    # Small, deterministic setup: window_size == hidden_size == 5 (see note above).
    window_size = 5
    hidden_size = 5
    batch = 4
    time_steps = 16

    key = jax.random.PRNGKey(0)
    k_series, k_w, k_b = jax.random.split(key, 3)

    series = jax.random.normal(k_series, (batch, time_steps), dtype=jnp.float32)

    # Deterministic nn.Linear-style init: U(-1/sqrt(in), 1/sqrt(in)).
    bound = 1.0 / math.sqrt(window_size)
    weight = jax.random.uniform(
        k_w, (hidden_size, window_size), dtype=jnp.float32, minval=-bound, maxval=bound
    )
    bias = jax.random.uniform(
        k_b, (hidden_size,), dtype=jnp.float32, minval=-bound, maxval=bound
    )
    change_point_threshold = jnp.float32(0.1)

    change_points, losses = llsa_forward(series, weight, bias, change_point_threshold)

    # Sanity-check the Pallas kernel against the pure-JAX reference.
    ref = _ref_losses(series, weight, bias)
    assert losses.shape == (time_steps - window_size,)
    assert jnp.allclose(losses, ref, atol=1e-5, rtol=1e-5), (losses, ref)
    ref_diffs = jnp.abs(ref[1:] - ref[:-1])
    _, diffs = llsa_losses(series, weight, bias)
    assert jnp.allclose(diffs[1:], ref_diffs, atol=1e-5, rtol=1e-5), (diffs, ref_diffs)

    jax.block_until_ready(losses)
    print("KERNEL_OK")
</pallas_src>

<mosaic_0001>
module attributes {stable_mosaic.version = 11 : i64} {
  func.func @_llsa_kernel(%arg0: memref<5x5xf32, #tpu.memory_space<smem>>, %arg1: memref<5xf32, #tpu.memory_space<smem>>, %arg2: memref<4x133xf32, #tpu.memory_space<vmem>>, %arg3: memref<1x128xf32, #tpu.memory_space<vmem>>, %arg4: memref<1x128xf32, #tpu.memory_space<vmem>>) attributes {dimension_semantics = [], scalar_prefetch = 0 : i64, scratch_operands = 0 : i64, tpu.core_type = #tpu.core_type<tc>} {
    %c0 = arith.constant 0 : index
    %c0_0 = arith.constant 0 : index
    %0 = vector.load %arg2[%c0, %c0_0] : memref<4x133xf32, #tpu.memory_space<vmem>>, vector<4x128xf32>
    %c0_1 = arith.constant 0 : index
    %c1 = arith.constant 1 : index
    %1 = vector.load %arg2[%c0_1, %c1] : memref<4x133xf32, #tpu.memory_space<vmem>>, vector<4x128xf32>
    %c0_2 = arith.constant 0 : index
    %c2 = arith.constant 2 : index
    %2 = vector.load %arg2[%c0_2, %c2] : memref<4x133xf32, #tpu.memory_space<vmem>>, vector<4x128xf32>
    %c0_3 = arith.constant 0 : index
    %c3 = arith.constant 3 : index
    %3 = vector.load %arg2[%c0_3, %c3] : memref<4x133xf32, #tpu.memory_space<vmem>>, vector<4x128xf32>
    %c0_4 = arith.constant 0 : index
    %c4 = arith.constant 4 : index
    %4 = vector.load %arg2[%c0_4, %c4] : memref<4x133xf32, #tpu.memory_space<vmem>>, vector<4x128xf32>
    %c0_5 = arith.constant 0 : index
    %c5 = arith.constant 5 : index
    %5 = vector.load %arg2[%c0_5, %c5] : memref<4x133xf32, #tpu.memory_space<vmem>>, vector<4x128xf32>
    %cst = arith.constant 0.000000e+00 : f32
    %6 = vector.broadcast %cst : f32 to vector<4x128xf32>
    %c0_6 = arith.constant 0 : index
    %c0_7 = arith.constant 0 : index
    %7 = memref.load %arg0[%c0_6, %c0_7] : memref<5x5xf32, #tpu.memory_space<smem>>
    %8 = vector.broadcast %7 : f32 to vector<4x128xf32>
    %9 = arith.mulf %0, %8 : vector<4x128xf32>
    %c0_8 = arith.constant 0 : index
    %c1_9 = arith.constant 1 : index
    %10 = memref.load %arg0[%c0_8, %c1_9] : memref<5x5xf32, #tpu.memory_space<smem>>
    %11 = vector.broadcast %10 : f32 to vector<4x128xf32>
    %12 = arith.mulf %1, %11 : vector<4x128xf32>
    %13 = arith.addf %9, %12 : vector<4x128xf32>
    %c0_10 = arith.constant 0 : index
    %c2_11 = arith.constant 2 : index
    %14 = memref.load %arg0[%c0_10, %c2_11] : memref<5x5xf32, #tpu.memory_space<smem>>
    %15 = vector.broadcast %14 : f32 to vector<4x128xf32>
    %16 = arith.mulf %2, %15 : vector<4x128xf32>
    %17 = arith.addf %13, %16 : vector<4x128xf32>
    %c0_12 = arith.constant 0 : index
    %c3_13 = arith.constant 3 : index
    %18 = memref.load %arg0[%c0_12, %c3_13] : memref<5x5xf32, #tpu.memory_space<smem>>
    %19 = vector.broadcast %18 : f32 to vector<4x128xf32>
    %20 = arith.mulf %3, %19 : vector<4x128xf32>
    %21 = arith.addf %17, %20 : vector<4x128xf32>
    %c0_14 = arith.constant 0 : index
    %c4_15 = arith.constant 4 : index
    %22 = memref.load %arg0[%c0_14, %c4_15] : memref<5x5xf32, #tpu.memory_space<smem>>
    %23 = vector.broadcast %22 : f32 to vector<4x128xf32>
    %24 = arith.mulf %4, %23 : vector<4x128xf32>
    %25 = arith.addf %21, %24 : vector<4x128xf32>
    %c0_16 = arith.constant 0 : index
    %26 = memref.load %arg1[%c0_16] : memref<5xf32, #tpu.memory_space<smem>>
    %27 = vector.broadcast %26 : f32 to vector<4x128xf32>
    %28 = arith.addf %25, %27 : vector<4x128xf32>
    %29 = arith.subf %28, %1 : vector<4x128xf32>
    %30 = arith.mulf %29, %29 : vector<4x128xf32>
    %31 = arith.addf %6, %30 : vector<4x128xf32>
    %c1_17 = arith.constant 1 : index
    %c0_18 = arith.constant 0 : index
    %32 = memref.load %arg0[%c1_17, %c0_18] : memref<5x5xf32, #tpu.memory_space<smem>>
    %33 = vector.broadcast %32 : f32 to vector<4x128xf32>
    %34 = arith.mulf %0, %33 : vector<4x128xf32>
    %c1_19 = arith.constant 1 : index
    %c1_20 = arith.constant 1 : index
    %35 = memref.load %arg0[%c1_19, %c1_20] : memref<5x5xf32, #tpu.memory_space<smem>>
    %36 = vector.broadcast %35 : f32 to vector<4x128xf32>
    %37 = arith.mulf %1, %36 : vector<4x128xf32>
    %38 = arith.addf %34, %37 : vector<4x128xf32>
    %c1_21 = arith.constant 1 : index
    %c2_22 = arith.constant 2 : index
    %39 = memref.load %arg0[%c1_21, %c2_22] : memref<5x5xf32, #tpu.memory_space<smem>>
    %40 = vector.broadcast %39 : f32 to vector<4x128xf32>
    %41 = arith.mulf %2, %40 : vector<4x128xf32>
    %42 = arith.addf %38, %41 : vector<4x128xf32>
    %c1_23 = arith.constant 1 : index
    %c3_24 = arith.constant 3 : index
    %43 = memref.load %arg0[%c1_23, %c3_24] : memref<5x5xf32, #tpu.memory_space<smem>>
    %44 = vector.broadcast %43 : f32 to vector<4x128xf32>
    %45 = arith.mulf %3, %44 : vector<4x128xf32>
    %46 = arith.addf %42, %45 : vector<4x128xf32>
    %c1_25 = arith.constant 1 : index
    %c4_26 = arith.constant 4 : index
    %47 = memref.load %arg0[%c1_25, %c4_26] : memref<5x5xf32, #tpu.memory_space<smem>>
    %48 = vector.broadcast %47 : f32 to vector<4x128xf32>
    %49 = arith.mulf %4, %48 : vector<4x128xf32>
    %50 = arith.addf %46, %49 : vector<4x128xf32>
    %c1_27 = arith.constant 1 : index
    %51 = memref.load %arg1[%c1_27] : memref<5xf32, #tpu.memory_space<smem>>
    %52 = vector.broadcast %51 : f32 to vector<4x128xf32>
    %53 = arith.addf %50, %52 : vector<4x128xf32>
    %54 = arith.subf %53, %2 : vector<4x128xf32>
    %55 = arith.mulf %54, %54 : vector<4x128xf32>
    %56 = arith.addf %31, %55 : vector<4x128xf32>
    %c2_28 = arith.constant 2 : index
    %c0_29 = arith.constant 0 : index
    %57 = memref.load %arg0[%c2_28, %c0_29] : memref<5x5xf32, #tpu.memory_space<smem>>
    %58 = vector.broadcast %57 : f32 to vector<4x128xf32>
    %59 = arith.mulf %0, %58 : vector<4x128xf32>
    %c2_30 = arith.constant 2 : index
    %c1_31 = arith.constant 1 : index
    %60 = memref.load %arg0[%c2_30, %c1_31] : memref<5x5xf32, #tpu.memory_space<smem>>
    %61 = vector.broadcast %60 : f32 to vector<4x128xf32>
    %62 = arith.mulf %1, %61 : vector<4x128xf32>
    %63 = arith.addf %59, %62 : vector<4x128xf32>
    %c2_32 = arith.constant 2 : index
    %c2_33 = arith.constant 2 : index
    %64 = memref.load %arg0[%c2_32, %c2_33] : memref<5x5xf32, #tpu.memory_space<smem>>
    %65 = vector.broadcast %64 : f32 to vector<4x128xf32>
    %66 = arith.mulf %2, %65 : vector<4x128xf32>
    %67 = arith.addf %63, %66 : vector<4x128xf32>
    %c2_34 = arith.constant 2 : index
    %c3_35 = arith.constant 3 : index
    %68 = memref.load %arg0[%c2_34, %c3_35] : memref<5x5xf32, #tpu.memory_space<smem>>
    %69 = vector.broadcast %68 : f32 to vector<4x128xf32>
    %70 = arith.mulf %3, %69 : vector<4x128xf32>
    %71 = arith.addf %67, %70 : vector<4x128xf32>
    %c2_36 = arith.constant 2 : index
    %c4_37 = arith.constant 4 : index
    %72 = memref.load %arg0[%c2_36, %c4_37] : memref<5x5xf32, #tpu.memory_space<smem>>
    %73 = vector.broadcast %72 : f32 to vector<4x128xf32>
    %74 = arith.mulf %4, %73 : vector<4x128xf32>
    %75 = arith.addf %71, %74 : vector<4x128xf32>
    %c2_38 = arith.constant 2 : index
    %76 = memref.load %arg1[%c2_38] : memref<5xf32, #tpu.memory_space<smem>>
    %77 = vector.broadcast %76 : f32 to vector<4x128xf32>
    %78 = arith.addf %75, %77 : vector<4x128xf32>
    %79 = arith.subf %78, %3 : vector<4x128xf32>
    %80 = arith.mulf %79, %79 : vector<4x128xf32>
    %81 = arith.addf %56, %80 : vector<4x128xf32>
    %c3_39 = arith.constant 3 : index
    %c0_40 = arith.constant 0 : index
    %82 = memref.load %arg0[%c3_39, %c0_40] : memref<5x5xf32, #tpu.memory_space<smem>>
    %83 = vector.broadcast %82 : f32 to vector<4x128xf32>
    %84 = arith.mulf %0, %83 : vector<4x128xf32>
    %c3_41 = arith.constant 3 : index
    %c1_42 = arith.constant 1 : index
    %85 = memref.load %arg0[%c3_41, %c1_42] : memref<5x5xf32, #tpu.memory_space<smem>>
    %86 = vector.broadcast %85 : f32 to vector<4x128xf32>
    %87 = arith.mulf %1, %86 : vector<4x128xf32>
    %88 = arith.addf %84, %87 : vector<4x128xf32>
    %c3_43 = arith.constant 3 : index
    %c2_44 = arith.constant 2 : index
    %89 = memref.load %arg0[%c3_43, %c2_44] : memref<5x5xf32, #tpu.memory_space<smem>>
    %90 = vector.broadcast %89 : f32 to vector<4x128xf32>
    %91 = arith.mulf %2, %90 : vector<4x128xf32>
    %92 = arith.addf %88, %91 : vector<4x128xf32>
    %c3_45 = arith.constant 3 : index
    %c3_46 = arith.constant 3 : index
    %93 = memref.load %arg0[%c3_45, %c3_46] : memref<5x5xf32, #tpu.memory_space<smem>>
    %94 = vector.broadcast %93 : f32 to vector<4x128xf32>
    %95 = arith.mulf %3, %94 : vector<4x128xf32>
    %96 = arith.addf %92, %95 : vector<4x128xf32>
    %c3_47 = arith.constant 3 : index
    %c4_48 = arith.constant 4 : index
    %97 = memref.load %arg0[%c3_47, %c4_48] : memref<5x5xf32, #tpu.memory_space<smem>>
    %98 = vector.broadcast %97 : f32 to vector<4x128xf32>
    %99 = arith.mulf %4, %98 : vector<4x128xf32>
    %100 = arith.addf %96, %99 : vector<4x128xf32>
    %c3_49 = arith.constant 3 : index
    %101 = memref.load %arg1[%c3_49] : memref<5xf32, #tpu.memory_space<smem>>
    %102 = vector.broadcast %101 : f32 to vector<4x128xf32>
    %103 = arith.addf %100, %102 : vector<4x128xf32>
    %104 = arith.subf %103, %4 : vector<4x128xf32>
    %105 = arith.mulf %104, %104 : vector<4x128xf32>
    %106 = arith.addf %81, %105 : vector<4x128xf32>
    %c4_50 = arith.constant 4 : index
    %c0_51 = arith.constant 0 : index
    %107 = memref.load %arg0[%c4_50, %c0_51] : memref<5x5xf32, #tpu.memory_space<smem>>
    %108 = vector.broadcast %107 : f32 to vector<4x128xf32>
    %109 = arith.mulf %0, %108 : vector<4x128xf32>
    %c4_52 = arith.constant 4 : index
    %c1_53 = arith.constant 1 : index
    %110 = memref.load %arg0[%c4_52, %c1_53] : memref<5x5xf32, #tpu.memory_space<smem>>
    %111 = vector.broadcast %110 : f32 to vector<4x128xf32>
    %112 = arith.mulf %1, %111 : vector<4x128xf32>
    %113 = arith.addf %109, %112 : vector<4x128xf32>
    %c4_54 = arith.constant 4 : index
    %c2_55 = arith.constant 2 : index
    %114 = memref.load %arg0[%c4_54, %c2_55] : memref<5x5xf32, #tpu.memory_space<smem>>
    %115 = vector.broadcast %114 : f32 to vector<4x128xf32>
    %116 = arith.mulf %2, %115 : vector<4x128xf32>
    %117 = arith.addf %113, %116 : vector<4x128xf32>
    %c4_56 = arith.constant 4 : index
    %c3_57 = arith.constant 3 : index
    %118 = memref.load %arg0[%c4_56, %c3_57] : memref<5x5xf32, #tpu.memory_space<smem>>
    %119 = vector.broadcast %118 : f32 to vector<4x128xf32>
    %120 = arith.mulf %3, %119 : vector<4x128xf32>
    %121 = arith.addf %117, %120 : vector<4x128xf32>
    %c4_58 = arith.constant 4 : index
    %c4_59 = arith.constant 4 : index
    %122 = memref.load %arg0[%c4_58, %c4_59] : memref<5x5xf32, #tpu.memory_space<smem>>
    %123 = vector.broadcast %122 : f32 to vector<4x128xf32>
    %124 = arith.mulf %4, %123 : vector<4x128xf32>
    %125 = arith.addf %121, %124 : vector<4x128xf32>
    %c4_60 = arith.constant 4 : index
    %126 = memref.load %arg1[%c4_60] : memref<5xf32, #tpu.memory_space<smem>>
    %127 = vector.broadcast %126 : f32 to vector<4x128xf32>
    %128 = arith.addf %125, %127 : vector<4x128xf32>
    %129 = arith.subf %128, %5 : vector<4x128xf32>
    %130 = arith.mulf %129, %129 : vector<4x128xf32>
    %131 = arith.addf %106, %130 : vector<4x128xf32>
    %cst_61 = arith.constant dense<0.000000e+00> : vector<128xf32>
    %132 = vector.multi_reduction <add>, %131, %cst_61 [0] : vector<4x128xf32> to vector<128xf32>
    %133 = vector.shape_cast %132 : vector<128xf32> to vector<1x128xf32>
    %cst_62 = arith.constant 5.000000e-02 : f32
    %134 = vector.broadcast %cst_62 : f32 to vector<1x128xf32>
    %135 = arith.mulf %133, %134 : vector<1x128xf32>
    %c0_63 = arith.constant 0 : index
    %c0_64 = arith.constant 0 : index
    %136 = vector.load %arg3[%c0_63, %c0_64] : memref<1x128xf32, #tpu.memory_space<vmem>>, vector<1x128xf32>
    tpu.vector_store %arg3[%c0_63, %c0_64], %135 {strides = array<i32>} : memref<1x128xf32, #tpu.memory_space<vmem>>, vector<1x128xf32>,
    %c1_i32 = arith.constant 1 : i32
    %137 = tpu.dynamic_rotate %135 by %c1_i32 dim 1 : vector<1x128xf32>, i32 -> vector<1x128xf32>
    %138 = tpu.iota {dimensions = array<i32: 1>} : vector<1x128xi32>
    %c0_i32 = arith.constant 0 : i32
    %139 = vector.broadcast %c0_i32 : i32 to vector<1x128xi32>
    %140 = arith.cmpi eq, %138, %139 : vector<1x128xi32>
    %141 = arith.subf %135, %137 : vector<1x128xf32>
    %142 = math.absf %141 : vector<1x128xf32>
    %cst_65 = arith.constant 0.000000e+00 : f32
    %143 = vector.broadcast %cst_65 : f32 to vector<1x128xf32>
    %144 = arith.select %140, %143, %142 : vector<1x128xi1>, vector<1x128xf32>
    %c0_66 = arith.constant 0 : index
    %c0_67 = arith.constant 0 : index
    %145 = vector.load %arg4[%c0_66, %c0_67] : memref<1x128xf32, #tpu.memory_space<vmem>>, vector<1x128xf32>
    tpu.vector_store %arg4[%c0_66, %c0_67], %144 {strides = array<i32>} : memref<1x128xf32, #tpu.memory_space<vmem>>, vector<1x128xf32>,
    return
  }
}

</mosaic_0001>

<llo_original>
// kernel: tpu_custom_call.1
$region0: #{tpu_custom_call.1}
  #allocation0 [shape = 'u32[]', space=smem, size = 0x4, offset = 0x4, fixed_abs, tag = 'smem constant byte address 0x4 - core index']
  #allocation1 [shape = 'u32[144,128]{1,0:T(1,128)}', space=vmem, size = 0x12000, scoped, tag = 'internal scratch']
  %s0 = inlined_call_operand.hbm [shape: f32[5,5], index: 0, kind: input, shape index: {}]
  %s1 = inlined_call_operand.vmem [shape: f32[5], index: 1, kind: input, shape index: {}]
  %s2 = inlined_call_operand.hbm [shape: f32[4,133], index: 2, kind: input, shape index: {}]
  %s3 = inlined_call_operand.hbm [shape: f32[1,128], index: 3, kind: output, shape index: {0}]
  %s4 = inlined_call_operand.hbm [shape: f32[1,128], index: 4, kind: output, shape index: {1}]
  %5 = xla_tuple %s3, %s4
  %s6 = sld [smem:[#allocation0]]
  $region42: #{tpu_custom_call.1} parent=0
    _
  %s8 = ssub.s32 1, %s6
  %s9 = scalar_select 0, %s8, %s6
  $region1: #{tpu_custom_call.1} parent=0
    #allocation2 [shape = 'u8[4096]{0}', space=smem, size = 0x1000, scoped, tag = 'input window, operand 0, single buffered']
    #allocation3 [shape = 's32[1]{0}', space=sflag, size = 0x4, scoped, tag = 'scoped memory for tpu_custom_call.1']
    #allocation4 [shape = 's32[1]{0}', space=sflag, size = 0x4, scoped, tag = 'scoped memory for tpu_custom_call.1']
    #allocation5 [shape = 's32[1]{0}', space=sflag, size = 0x4, scoped, tag = 'scoped memory for tpu_custom_call.1']
    #allocation6 [shape = 's32[1]{0}', space=sflag, size = 0x4, scoped, tag = 'scoped memory for tpu_custom_call.1']
    #allocation7 [shape = 'u8[512]{0}', space=smem, size = 0x200, scoped, tag = 'input window, operand 1, single buffered']
    #allocation8 [shape = 'u8[4096]{0}', space=vmem, size = 0x1000, scoped, tag = 'input window, operand 2, single buffered']
    #allocation9 [shape = 'u8[512]{0}', space=vmem, size = 0x400, scoped, tag = 'output window, operand 0, single buffered']
    #allocation10 [shape = 'u8[512]{0}', space=vmem, size = 0x400, scoped, tag = 'output window, operand 1, single buffered']
    #allocation11 [shape = 's32[1]{0}', space=sflag, size = 0x4, scoped, tag = 'scoped memory for tpu_custom_call.1']
    %10 = vsyncpa [#allocation5], 0
    %11 = vsyncpa [#allocation6], 0
    %12 = vsyncpa [#allocation3], 0
    %13 = vsyncpa [#allocation4], 0
    %14 = vsyncpa [#allocation11], 0
    // Predicated region
    $region2: #{tpu_custom_call.1} parent=1 // pred_check
      _
    $region3: #{tpu_custom_call.1} parent=1 // pred_check_branch
      %16 = sbr.rel (0) target = $region5
    $region4: #{tpu_custom_call.1} parent=1 // pred_region
      %s18 = ssub.s32 128, 128
      %19 = vsyncadd [#allocation5], %s18
      %22 = dma.hbm_to_smem %s0, 128, [#allocation2], [#allocation5]
    $region5: #{tpu_custom_call.1} parent=1 // pred_fallthru
      _
    // Predicated region
    $region6: #{tpu_custom_call.1} parent=1 // pred_check
      _
    $region7: #{tpu_custom_call.1} parent=1 // pred_check_branch
      %24 = sbr.rel (0) target = $region9
    $region8: #{tpu_custom_call.1} parent=1 // pred_region
      %s26 = ssub.s32 16, 16
      %27 = vsyncadd [#allocation6], %s26
      %s29 = sshll.u32 %s1, 4
      %s30 = int_to_ptr.vmem [resolvable:$true] %s29
      %32 = dma.vmem_to_smem %s30, 16, [#allocation7], [#allocation6]
    $region9: #{tpu_custom_call.1} parent=1 // pred_fallthru
      _
    // Predicated region
    $region10: #{tpu_custom_call.1} parent=1 // pred_check
      _
    $region11: #{tpu_custom_call.1} parent=1 // pred_check_branch
      %34 = sbr.rel (0) target = $region13
    $region12: #{tpu_custom_call.1} parent=1 // pred_region
      %s36 = ssub.s32 128, 128
      %37 = vsyncadd [#allocation3], %s36
      %s39 = sshll.u32 [#allocation8], 4
      %s40 = int_to_ptr.vmem [resolvable:$true] %s39
      %42 = dma.hbm_to_vmem [thread:$0]  %s2, 128, %s40, [#allocation3]
    $region13: #{tpu_custom_call.1} parent=1 // pred_fallthru
      _
    // Predicated region
    $region14: #{tpu_custom_call.1} parent=1 // pred_check
      _
    $region15: #{tpu_custom_call.1} parent=1 // pred_check_branch
      %44 = sbr.rel (0) target = $region17
    $region16: #{tpu_custom_call.1} parent=1 // pred_region
      %45 = dma.done [#allocation5], 128
    $region17: #{tpu_custom_call.1} parent=1 // pred_fallthru
      _
    // Predicated region
    $region18: #{tpu_custom_call.1} parent=1 // pred_check
      _
    $region19: #{tpu_custom_call.1} parent=1 // pred_check_branch
      %47 = sbr.rel (0) target = $region21
    $region20: #{tpu_custom_call.1} parent=1 // pred_region
      %48 = dma.done [#allocation6], 16
    $region21: #{tpu_custom_call.1} parent=1 // pred_fallthru
      _
    // Predicated region
    $region22: #{tpu_custom_call.1} parent=1 // pred_check
      _
    $region23: #{tpu_custom_call.1} parent=1 // pred_check_branch
      %50 = sbr.rel (0) target = $region25
    $region24: #{tpu_custom_call.1} parent=1 // pred_region
      %51 = dma.done [#allocation3], 128
    $region25: #{tpu_custom_call.1} parent=1 // pred_fallthru
      _
    %52 = sfence
    %v53 = vld [vmem:[#allocation8] sm:$0xf]
    %v54 = vld [vmem:[#allocation8] sm:$0xff]
    %s55 = sld [smem:[#allocation2]]
    %v56 = vstv %s55
    %v57 = vmul.f32 %v53, %v56
    %s58 = sld [smem:[#allocation2 + $0x1]]
    %v59 = vstv %s58
    %v60 = vmul.f32 %v54, %v59
    %62 = vrot.lane.b32.xlu0 %v60, 127
    %v63 = vpop.permute.xlu0 %62
    %v64 = vrot.slane %v63, 4
    %vm65 = vcmask 1039360
    %v66 = vsel %vm65, %v63, %v64
    %v68 = vadd.f32 %v57, %v66
    %s69 = sld [smem:[#allocation2 + $0x2]]
    %v70 = vstv %s69
    %v71 = vmul.f32 %v54, %v70
    %73 = vrot.lane.b32.xlu0 %v71, 126
    %v74 = vpop.permute.xlu0 %73
    %v75 = vrot.slane %v74, 4
    %vm76 = vcmask 1031168
    %v77 = vsel %vm76, %v74, %v75
    %v79 = vadd.f32 %v68, %v77
    %s80 = sld [smem:[#allocation2 + $0x3]]
    %v81 = vstv %s80
    %v82 = vmul.f32 %v54, %v81
    %84 = vrot.lane.b32.xlu0 %v82, 125
    %v85 = vpop.permute.xlu0 %84
    %v86 = vrot.slane %v85, 4
    %vm87 = vcmask 1022976
    %v88 = vsel %vm87, %v85, %v86
    %v90 = vadd.f32 %v79, %v88
    %s91 = sld [smem:[#allocation2 + $0x4]]
    %v92 = vstv %s91
    %v93 = vmul.f32 %v54, %v92
    %95 = vrot.lane.b32.xlu0 %v93, 124
    %v96 = vpop.permute.xlu0 %95
    %v97 = vrot.slane %v96, 4
    %vm98 = vcmask 1014784
    %v99 = vsel %vm98, %v96, %v97
    %v101 = vadd.f32 %v90, %v99
    %s102 = sld [smem:[#allocation7]]
    %v103 = vstv %s102
    %v104 = vadd.f32 %v101, %v103
    %106 = vrot.lane.b32.xlu0 %v54, 127
    %v107 = vpop.permute.xlu0 %106
    %v108 = vrot.slane %v107, 4
    %v109 = vsel %vm65, %v107, %v108
    %v111 = vsub.f32 %v104, %v109
    %v112 = vmul.f32 %v111, %v111
    %v113 = vadd.f32 %v112, 0.0
    %s114 = sld [smem:[#allocation2 + $0x80]]
    %v115 = vstv %s114
    %v116 = vmul.f32 %v53, %v115
    %s117 = sld [smem:[#allocation2 + $0x81]]
    %v118 = vstv %s117
    %v119 = vmul.f32 %v54, %v118
    %121 = vrot.lane.b32.xlu0 %v119, 127
    %v122 = vpop.permute.xlu0 %121
    %v123 = vrot.slane %v122, 4
    %v124 = vsel %vm65, %v122, %v123
    %v126 = vadd.f32 %v116, %v124
    %s127 = sld [smem:[#allocation2 + $0x82]]
    %v128 = vstv %s127
    %v129 = vmul.f32 %v54, %v128
    %131 = vrot.lane.b32.xlu0 %v129, 126
    %v132 = vpop.permute.xlu0 %131
    %v133 = vrot.slane %v132, 4
    %v134 = vsel %vm76, %v132, %v133
    %v136 = vadd.f32 %v126, %v134
    %s137 = sld [smem:[#allocation2 + $0x83]]
    %v138 = vstv %s137
    %v139 = vmul.f32 %v54, %v138
    %141 = vrot.lane.b32.xlu0 %v139, 125
    %v142 = vpop.permute.xlu0 %141
    %v143 = vrot.slane %v142, 4
    %v144 = vsel %vm87, %v142, %v143
    %v146 = vadd.f32 %v136, %v144
    %s147 = sld [smem:[#allocation2 + $0x84]]
    %v148 = vstv %s147
    %v149 = vmul.f32 %v54, %v148
    %151 = vrot.lane.b32.xlu0 %v149, 124
    %v152 = vpop.permute.xlu0 %151
    %v153 = vrot.slane %v152, 4
    %v154 = vsel %vm98, %v152, %v153
    %v156 = vadd.f32 %v146, %v154
    %s157 = sld [smem:[#allocation7 + $0x1]]
    %v158 = vstv %s157
    %v159 = vadd.f32 %v156, %v158
    %160 = vrot.lane.b32.xlu0 %v54, 126
    %v161 = vpop.permute.xlu0 %160
    %v162 = vrot.slane %v161, 4
    %v163 = vsel %vm76, %v161, %v162
    %v165 = vsub.f32 %v159, %v163
    %v166 = vmul.f32 %v165, %v165
    %v167 = vadd.f32 %v113, %v166
    %s168 = sld [smem:[#allocation2 + $0x100]]
    %v169 = vstv %s168
    %v170 = vmul.f32 %v53, %v169
    %s171 = sld [smem:[#allocation2 + $0x101]]
    %v172 = vstv %s171
    %v173 = vmul.f32 %v54, %v172
    %175 = vrot.lane.b32.xlu0 %v173, 127
    %v176 = vpop.permute.xlu0 %175
    %v177 = vrot.slane %v176, 4
    %v178 = vsel %vm65, %v176, %v177
    %v180 = vadd.f32 %v170, %v178
    %s181 = sld [smem:[#allocation2 + $0x102]]
    %v182 = vstv %s181
    %v183 = vmul.f32 %v54, %v182
    %185 = vrot.lane.b32.xlu0 %v183, 126
    %v186 = vpop.permute.xlu0 %185
    %v187 = vrot.slane %v186, 4
    %v188 = vsel %vm76, %v186, %v187
    %v190 = vadd.f32 %v180, %v188
    %s191 = sld [smem:[#allocation2 + $0x103]]
    %v192 = vstv %s191
    %v193 = vmul.f32 %v54, %v192
    %195 = vrot.lane.b32.xlu0 %v193, 125
    %v196 = vpop.permute.xlu0 %195
    %v197 = vrot.slane %v196, 4
    %v198 = vsel %vm87, %v196, %v197
    %v200 = vadd.f32 %v190, %v198
    %s201 = sld [smem:[#allocation2 + $0x104]]
    %v202 = vstv %s201
    %v203 = vmul.f32 %v54, %v202
    %205 = vrot.lane.b32.xlu0 %v203, 124
    %v206 = vpop.permute.xlu0 %205
    %v207 = vrot.slane %v206, 4
    %v208 = vsel %vm98, %v206, %v207
    %v210 = vadd.f32 %v200, %v208
    %s211 = sld [smem:[#allocation7 + $0x2]]
    %v212 = vstv %s211
    %v213 = vadd.f32 %v210, %v212
    %214 = vrot.lane.b32.xlu0 %v54, 125
    %v215 = vpop.permute.xlu0 %214
    %v216 = vrot.slane %v215, 4
    %v217 = vsel %vm87, %v215, %v216
    %v219 = vsub.f32 %v213, %v217
    %v220 = vmul.f32 %v219, %v219
    %v221 = vadd.f32 %v167, %v220
    %s222 = sld [smem:[#allocation2 + $0x180]]
    %v223 = vstv %s222
    %v224 = vmul.f32 %v53, %v223
    %s225 = sld [smem:[#allocation2 + $0x181]]
    %v226 = vstv %s225
    %v227 = vmul.f32 %v54, %v226
    %229 = vrot.lane.b32.xlu0 %v227, 127
    %v230 = vpop.permute.xlu0 %229
    %v231 = vrot.slane %v230, 4
    %v232 = vsel %vm65, %v230, %v231
    %v234 = vadd.f32 %v224, %v232
    %s235 = sld [smem:[#allocation2 + $0x182]]
    %v236 = vstv %s235
    %v237 = vmul.f32 %v54, %v236
    %239 = vrot.lane.b32.xlu0 %v237, 126
    %v240 = vpop.permute.xlu0 %239
    %v241 = vrot.slane %v240, 4
    %v242 = vsel %vm76, %v240, %v241
    %v244 = vadd.f32 %v234, %v242
    %s245 = sld [smem:[#allocation2 + $0x183]]
    %v246 = vstv %s245
    %v247 = vmul.f32 %v54, %v246
    %249 = vrot.lane.b32.xlu0 %v247, 125
    %v250 = vpop.permute.xlu0 %249
    %v251 = vrot.slane %v250, 4
    %v252 = vsel %vm87, %v250, %v251
    %v254 = vadd.f32 %v244, %v252
    %s255 = sld [smem:[#allocation2 + $0x184]]
    %v256 = vstv %s255
    %v257 = vmul.f32 %v54, %v256
    %259 = vrot.lane.b32.xlu0 %v257, 124
    %v260 = vpop.permute.xlu0 %259
    %v261 = vrot.slane %v260, 4
    %v262 = vsel %vm98, %v260, %v261
    %v264 = vadd.f32 %v254, %v262
    %s265 = sld [smem:[#allocation7 + $0x3]]
    %v266 = vstv %s265
    %v267 = vadd.f32 %v264, %v266
    %268 = vrot.lane.b32.xlu0 %v54, 124
    %v269 = vpop.permute.xlu0 %268
    %v270 = vrot.slane %v269, 4
    %v271 = vsel %vm98, %v269, %v270
    %v273 = vsub.f32 %v267, %v271
    %v274 = vmul.f32 %v273, %v273
    %v275 = vadd.f32 %v221, %v274
    %s276 = sld [smem:[#allocation2 + $0x200]]
    %v277 = vstv %s276
    %v278 = vmul.f32 %v53, %v277
    %s279 = sld [smem:[#allocation2 + $0x201]]
    %v280 = vstv %s279
    %v281 = vmul.f32 %v54, %v280
    %283 = vrot.lane.b32.xlu0 %v281, 127
    %v284 = vpop.permute.xlu0 %283
    %v285 = vrot.slane %v284, 4
    %v286 = vsel %vm65, %v284, %v285
    %v288 = vadd.f32 %v278, %v286
    %s289 = sld [smem:[#allocation2 + $0x202]]
    %v290 = vstv %s289
    %v291 = vmul.f32 %v54, %v290
    %293 = vrot.lane.b32.xlu0 %v291, 126
    %v294 = vpop.permute.xlu0 %293
    %v295 = vrot.slane %v294, 4
    %v296 = vsel %vm76, %v294, %v295
    %v298 = vadd.f32 %v288, %v296
    %s299 = sld [smem:[#allocation2 + $0x203]]
    %v300 = vstv %s299
    %v301 = vmul.f32 %v54, %v300
    %303 = vrot.lane.b32.xlu0 %v301, 125
    %v304 = vpop.permute.xlu0 %303
    %v305 = vrot.slane %v304, 4
    %v306 = vsel %vm87, %v304, %v305
    %v308 = vadd.f32 %v298, %v306
    %s309 = sld [smem:[#allocation2 + $0x204]]
    %v310 = vstv %s309
    %v311 = vmul.f32 %v54, %v310
    %313 = vrot.lane.b32.xlu0 %v311, 124
    %v314 = vpop.permute.xlu0 %313
    %v315 = vrot.slane %v314, 4
    %v316 = vsel %vm98, %v314, %v315
    %v318 = vadd.f32 %v308, %v316
    %s319 = sld [smem:[#allocation7 + $0x4]]
    %v320 = vstv %s319
    %v321 = vadd.f32 %v318, %v320
    %322 = vrot.lane.b32.xlu0 %v54, 123
    %v323 = vpop.permute.xlu0 %322
    %v324 = vrot.slane %v323, 4
    %vm325 = vcmask 1006592
    %v326 = vsel %vm325, %v323, %v324
    %v328 = vsub.f32 %v321, %v326
    %v329 = vmul.f32 %v328, %v328
    %v330 = vadd.f32 %v275, %v329
    %vm331 = vcmask 1043456
    %v332 = vsel %vm331, %v330, 0.0
    %v333 = vrot.slane %v332, 4
    %v334 = vadd.f32 %v332, %v333
    %v335 = vrot.slane %v334, 2
    %v336 = vadd.f32 %v334, %v335
    %v337 = vrot.slane %v336, 1
    %v338 = vadd.f32 %v336, %v337
    %v339 = vmul.f32 %v338, 0.05
    %340 = vst [vmem:[#allocation9] sm:$0x1] %v339
    %341 = vrot.lane.b32.xlu0 %v339, 1
    %v342 = vpop.permute.xlu0 %341
    %v343 = vlaneseq
    %v344 = vand.u32 %v343, 127
    %vm345 = vcmp.eq.s32.totalorder %v344, 0
    %v346 = vsub.f32 %v339, %v342
    %v347 = vand.u32 2147483647, %v346
    %v348 = vsel %vm345, 0.0, %v347
    %349 = vst [vmem:[#allocation10] sm:$0x1] %v348
    // Predicated region
    $region26: #{tpu_custom_call.1} parent=1 // pred_check
      _
    $region27: #{tpu_custom_call.1} parent=1 // pred_check_branch
      %351 = sbr.rel (0) target = $region29
    $region28: #{tpu_custom_call.1} parent=1 // pred_region
      %s353 = ssub.s32 16, 16
      %354 = vsyncadd [#allocation4], %s353
      %s356 = sshll.u32 [#allocation9], 4
      %s357 = int_to_ptr.vmem [resolvable:$true] %s356
      %359 = dma.vmem_to_hbm [thread:$0]  %s357, 16, %s3, [#allocation4]
    $region29: #{tpu_custom_call.1} parent=1 // pred_fallthru
      _
    // Predicated region
    $region30: #{tpu_custom_call.1} parent=1 // pred_check
      _
    $region31: #{tpu_custom_call.1} parent=1 // pred_check_branch
      %361 = sbr.rel (0) target = $region33
    $region32: #{tpu_custom_call.1} parent=1 // pred_region
      %s363 = ssub.s32 16, 16
      %364 = vsyncadd [#allocation11], %s363
      %s366 = sshll.u32 [#allocation10], 4
      %s367 = int_to_ptr.vmem [resolvable:$true] %s366
      %369 = dma.vmem_to_hbm [thread:$0]  %s367, 16, %s4, [#allocation11]
    $region33: #{tpu_custom_call.1} parent=1 // pred_fallthru
      _
    // Predicated region
    $region34: #{tpu_custom_call.1} parent=1 // pred_check
      _
    $region35: #{tpu_custom_call.1} parent=1 // pred_check_branch
      %371 = sbr.rel (0) target = $region37
    $region36: #{tpu_custom_call.1} parent=1 // pred_region
      %372 = dma.done [#allocation4], 16
    $region37: #{tpu_custom_call.1} parent=1 // pred_fallthru
      _
    // Predicated region
    $region38: #{tpu_custom_call.1} parent=1 // pred_check
      _
    $region39: #{tpu_custom_call.1} parent=1 // pred_check_branch
      %374 = sbr.rel (0) target = $region41
    $region40: #{tpu_custom_call.1} parent=1 // pred_region
      %375 = dma.done [#allocation11], 16
    $region41: #{tpu_custom_call.1} parent=1 // pred_fallthru
      _
    %376 = vsyncpa [#allocation3], 1
    %377 = vsyncpa [#allocation4], 1
    %378 = vsyncpa [#allocation11], 1
    %379 = vsyncpa [#allocation5], 1
    %380 = vsyncpa [#allocation6], 1

</llo_original>
